<compile_context>
chip_gen: v5e
topology: v5e:2x2
jax: 0.10.0
libtpu: 0.0.40
codegen_flags: <defaults>
</compile_context>

<pallas_src>
import jax
import jax.numpy as jnp
from jax.experimental import pallas as pl
from jax.experimental.pallas import tpu as pltpu


def _make_i3d_head_kernel(inv_s):
    """inv_s: static Python float = 1 / (T*H*W), folded in at the final step."""

    def kernel(x_ref, w_ref, b_ref, o_ref, acc_ref):
        # x_ref: (tn, C, ts)   current x tile (C on sublanes, S on lanes)
        # w_ref: (C, Kp)       fc weight, transposed + lane-padded
        # b_ref: (1, Kp)       fc bias, lane-padded
        # o_ref: (tn, Kp)      logits tile
        # acc_ref: (tn, C)     f32 running sum over S
        s_idx = pl.program_id(1)

        @pl.when(s_idx == 0)
        def _():
            acc_ref[...] = jnp.zeros_like(acc_ref)

        # Sum this S tile over the lane axis, accumulating in f32 without
        # materializing an f32 copy of the whole tile.
        acc_ref[...] += jnp.sum(x_ref[...], axis=-1, dtype=jnp.float32)

        @pl.when(s_idx == pl.num_programs(1) - 1)
        def _():
            # TODO(synk): dropout omitted — nn.Dropout is identity in eval mode.
            pooled = acc_ref[...] * inv_s  # fold the mean's 1/S here, once
            logits = jnp.dot(
                pooled,
                w_ref[...].astype(jnp.float32),
                preferred_element_type=jnp.float32,
            )
            o_ref[...] = (logits + b_ref[...].astype(jnp.float32)).astype(o_ref.dtype)

    return kernel


def _s_tiling(s, max_tile=512):
    """Pick an S tile (lane axis). Returns (ts, s_padded)."""
    if s <= max_tile:
        return s, s  # single full-extent tile (always legal)
    # Prefer a divisor of s that is a multiple of 128 (no padding needed).
    for ts in range(max_tile - max_tile % 128, 127, -128):
        if s % ts == 0:
            return ts, s
    # Rare fallback: pad S up with zeros (zeros do not change the sum).
    ts = max_tile - max_tile % 128
    return ts, ((s + ts - 1) // ts) * ts


def _n_tiling(n, max_tile=128):
    """Pick an N tile satisfying the (8,128) rule on the output block."""
    if n <= max_tile:
        return n  # full extent — always legal
    for tn in range(max_tile, 7, -8):
        if n % tn == 0:
            return tn
    return n  # fall back to one big tile (full extent)


def i3d_head_forward(x_ncthw, fc_weight, fc_bias):
    """x_ncthw: (N, C, T, H, W); fc_weight: (K, C) PyTorch layout; fc_bias: (K,)."""
    n, c, t, h, w = x_ncthw.shape
    k = fc_weight.shape[0]
    s = t * h * w

    # Pure reshape (no HBM rewrite): (N, C, T, H, W) -> (N, C, S).
    x_ncs = x_ncthw.reshape(n, c, s)

    ts, s_pad = _s_tiling(s)
    if s_pad != s:
        x_ncs = jnp.pad(x_ncs, ((0, 0), (0, 0), (0, s_pad - s)))
    tn = _n_tiling(n)

    # Lane-dense output: pad K up to a multiple of 128; slice off after.
    kp = ((k + 127) // 128) * 128
    w_ck = jnp.pad(jnp.transpose(fc_weight, (1, 0)), ((0, 0), (0, kp - k)))  # (C, Kp)
    b_1k = jnp.pad(fc_bias.reshape(1, k), ((0, 0), (0, kp - k)))             # (1, Kp)

    grid = (n // tn, s_pad // ts)

    out = pl.pallas_call(
        _make_i3d_head_kernel(1.0 / float(s)),
        out_shape=jax.ShapeDtypeStruct((n, kp), jnp.float32),
        grid_spec=pltpu.PrefetchScalarGridSpec(
            num_scalar_prefetch=0,
            grid=grid,
            in_specs=[
                pl.BlockSpec((tn, c, ts), lambda i, j: (i, 0, j)),
                pl.BlockSpec((c, kp), lambda i, j: (0, 0)),
                pl.BlockSpec((1, kp), lambda i, j: (0, 0)),
            ],
            out_specs=pl.BlockSpec((tn, kp), lambda i, j: (i, 0)),
            scratch_shapes=[pltpu.VMEM((tn, c), jnp.float32)],
        ),
        compiler_params=pltpu.CompilerParams(
            dimension_semantics=("parallel", "arbitrary"),
            vmem_limit_bytes=64 * 1024 * 1024,
        ),
    )(x_ncs, w_ck, b_1k)

    return out[:, :k]


if __name__ == "__main__":
    # Small shapes consistent with the module: N=2, C(in_channels)=32,
    # T=4, H=4, W=4, num_classes=16.
    N, C, T, H, W = 2, 32, 4, 4, 4
    NUM_CLASSES = 16

    key = jax.random.PRNGKey(0)
    kx, kw = jax.random.split(key)

    x = jax.random.normal(kx, (N, C, T, H, W), dtype=jnp.float32)

    # Deterministic param init mirroring _init_weights: weight ~ N(0, 0.01), bias = 0.
    fc_weight = 0.01 * jax.random.normal(kw, (NUM_CLASSES, C), dtype=jnp.float32)
    fc_bias = jnp.zeros((NUM_CLASSES,), dtype=jnp.float32)

    out = i3d_head_forward(x, fc_weight, fc_bias)
    out = jax.block_until_ready(out)

    # Pure-JAX reference check of the same semantics.
    ref = jnp.mean(x, axis=(2, 3, 4)) @ fc_weight.T + fc_bias
    assert out.shape == (N, NUM_CLASSES)
    assert jnp.allclose(out, ref, atol=1e-5, rtol=1e-5)

    print("KERNEL_OK")
</pallas_src>

<mosaic_0001>
module attributes {stable_mosaic.version = 11 : i64} {
  func.func @kernel(%arg0: i32, %arg1: i32, %arg2: memref<2x32x64xf32, #tpu.memory_space<vmem>>, %arg3: memref<32x128xf32, #tpu.memory_space<vmem>>, %arg4: memref<1x128xf32, #tpu.memory_space<vmem>>, %arg5: memref<2x128xf32, #tpu.memory_space<vmem>>, %arg6: memref<2x32xf32, #tpu.memory_space<vmem>>) attributes {dimension_semantics = [#tpu.dimension_semantics<parallel>, #tpu.dimension_semantics<arbitrary>], iteration_bounds = array<i64: 1, 1>, scalar_prefetch = 0 : i64, scratch_operands = 1 : i64, tpu.core_type = #tpu.core_type<tc>, window_params = [{transform_indices = @transform_0, window_bounds = array<i64: 2, 32, 64>}, {pipeline_mode = #tpu.pipeline_mode<synchronous>, transform_indices = @transform_1, window_bounds = array<i64: 32, 128>}, {pipeline_mode = #tpu.pipeline_mode<synchronous>, transform_indices = @transform_2, window_bounds = array<i64: 1, 128>}, {transform_indices = @transform_3, window_bounds = array<i64: 2, 128>}]} {
    %c0_i32 = arith.constant 0 : i32
    %0 = arith.cmpi eq, %arg1, %c0_i32 : i32
    %1 = arith.extui %0 : i1 to i32
    %c0_i32_0 = arith.constant 0 : i32
    %2 = arith.cmpi ne, %1, %c0_i32_0 : i32
    scf.if %2 {
      %cst_9 = arith.constant 0.000000e+00 : f32
      %11 = vector.broadcast %cst_9 : f32 to vector<2x32xf32>
      %c0_10 = arith.constant 0 : index
      %c0_11 = arith.constant 0 : index
      %12 = vector.load %arg6[%c0_10, %c0_11] : memref<2x32xf32, #tpu.memory_space<vmem>>, vector<2x32xf32>
      tpu.vector_store %arg6[%c0_10, %c0_11], %11 {strides = array<i32>} : memref<2x32xf32, #tpu.memory_space<vmem>>, vector<2x32xf32>,
    } else {
    }
    %c0 = arith.constant 0 : index
    %c0_1 = arith.constant 0 : index
    %3 = vector.load %arg6[%c0, %c0_1] : memref<2x32xf32, #tpu.memory_space<vmem>>, vector<2x32xf32>
    %c0_2 = arith.constant 0 : index
    %c0_3 = arith.constant 0 : index
    %c0_4 = arith.constant 0 : index
    %4 = vector.load %arg2[%c0_2, %c0_3, %c0_4] : memref<2x32x64xf32, #tpu.memory_space<vmem>>, vector<2x32x64xf32>
    %cst = arith.constant dense<0.000000e+00> : vector<2x32xf32>
    %5 = vector.multi_reduction <add>, %4, %cst [2] : vector<2x32x64xf32> to vector<2x32xf32>
    %6 = arith.addf %3, %5 : vector<2x32xf32>
    %c0_5 = arith.constant 0 : index
    %c0_6 = arith.constant 0 : index
    %7 = vector.load %arg6[%c0_5, %c0_6] : memref<2x32xf32, #tpu.memory_space<vmem>>, vector<2x32xf32>
    tpu.vector_store %arg6[%c0_5, %c0_6], %6 {strides = array<i32>} : memref<2x32xf32, #tpu.memory_space<vmem>>, vector<2x32xf32>,
    %c0_i32_7 = arith.constant 0 : i32
    %8 = arith.cmpi eq, %arg1, %c0_i32_7 : i32
    %9 = arith.extui %8 : i1 to i32
    %c0_i32_8 = arith.constant 0 : i32
    %10 = arith.cmpi ne, %9, %c0_i32_8 : i32
    scf.if %10 {
      %c0_9 = arith.constant 0 : index
      %c0_10 = arith.constant 0 : index
      %11 = vector.load %arg6[%c0_9, %c0_10] : memref<2x32xf32, #tpu.memory_space<vmem>>, vector<2x32xf32>
      %cst_11 = arith.constant 1.562500e-02 : f32
      %12 = vector.broadcast %cst_11 : f32 to vector<2x32xf32>
      %13 = arith.mulf %11, %12 : vector<2x32xf32>
      %c0_12 = arith.constant 0 : index
      %c0_13 = arith.constant 0 : index
      %14 = vector.load %arg3[%c0_12, %c0_13] : memref<32x128xf32, #tpu.memory_space<vmem>>, vector<32x128xf32>
      %cst_14 = arith.constant dense<0.000000e+00> : vector<2x128xf32>
      %15 = tpu.matmul %13, %14, %cst_14 {dimension_numbers = #tpu.dot_dimension_numbers<[1], [0], [0], [1], [0, 0, 1, 1], [], []>} : vector<2x32xf32>, vector<32x128xf32>, vector<2x128xf32> -> vector<2x128xf32>
      %c0_15 = arith.constant 0 : index
      %c0_16 = arith.constant 0 : index
      %16 = vector.load %arg4[%c0_15, %c0_16] : memref<1x128xf32, #tpu.memory_space<vmem>>, vector<1x128xf32>
      %17 = vector.broadcast %16 : vector<1x128xf32> to vector<2x128xf32>
      %18 = arith.addf %15, %17 : vector<2x128xf32>
      %c0_17 = arith.constant 0 : index
      %c0_18 = arith.constant 0 : index
      %19 = vector.load %arg5[%c0_17, %c0_18] : memref<2x128xf32, #tpu.memory_space<vmem>>, vector<2x128xf32>
      tpu.vector_store %arg5[%c0_17, %c0_18], %18 {strides = array<i32>} : memref<2x128xf32, #tpu.memory_space<vmem>>, vector<2x128xf32>,
    } else {
    }
    return
  }
  func.func @transform_0(%arg0: i32, %arg1: i32) -> (i32, i32, i32) {
    %c0_i32 = arith.constant 0 : i32
    %c0_i32_0 = arith.constant 0 : i32
    return %arg0, %c0_i32, %arg1 : i32, i32, i32
  }
  func.func @transform_1(%arg0: i32, %arg1: i32) -> (i32, i32) {
    %c0_i32 = arith.constant 0 : i32
    %c0_i32_0 = arith.constant 0 : i32
    %c0_i32_1 = arith.constant 0 : i32
    return %c0_i32, %c0_i32_0 : i32, i32
  }
  func.func @transform_2(%arg0: i32, %arg1: i32) -> (i32, i32) {
    %c0_i32 = arith.constant 0 : i32
    %c0_i32_0 = arith.constant 0 : i32
    %c0_i32_1 = arith.constant 0 : i32
    return %c0_i32, %c0_i32_0 : i32, i32
  }
  func.func @transform_3(%arg0: i32, %arg1: i32) -> (i32, i32) {
    %c0_i32 = arith.constant 0 : i32
    %c0_i32_0 = arith.constant 0 : i32
    return %arg0, %c0_i32 : i32, i32
  }
}

</mosaic_0001>

<llo_original>
// kernel: tpu_custom_call.1
$region0: #{tpu_custom_call.1}
  #allocation0 [shape = 'u32[]', space=smem, size = 0x4, offset = 0x4, fixed_abs, tag = 'smem constant byte address 0x4 - core index']
  #allocation1 [shape = 'u32[72,128]{1,0:T(1,128)}', space=vmem, size = 0x9000, scoped, tag = 'internal scratch']
  #allocation2 [shape = 'f32[2,32]{1,0:T(2,128)}', space=vmem, size = 0x400, scoped, tag = 'scratch operand']
  %s0 = inlined_call_operand.hbm [shape: f32[2,32,64], index: 0, kind: input, shape index: {}]
  %s1 = inlined_call_operand.hbm [shape: f32[32,128], index: 1, kind: input, shape index: {}]
  %s2 = inlined_call_operand.vmem [shape: f32[1,128], index: 2, kind: input, shape index: {}]
  %s3 = inlined_call_operand.hbm [shape: f32[2,128], index: 3, kind: output, shape index: {}]
  %s4 = sld [smem:[#allocation0]]
  $region38: #{tpu_custom_call.1} parent=0
    _
  %s6 = ssub.s32 1, %s4
  %s7 = scalar_select 0, %s6, %s4
  $region1: #{tpu_custom_call.1} parent=0
    #allocation3 [shape = 'u8[32768]{0}', space=vmem, size = 0x8000, scoped, tag = 'input window, operand 0, single buffered']
    #allocation4 [shape = 's32[1]{0}', space=sflag, size = 0x4, scoped, tag = 'scoped memory for tpu_custom_call.1']
    #allocation5 [shape = 's32[1]{0}', space=sflag, size = 0x4, scoped, tag = 'scoped memory for tpu_custom_call.1']
    #allocation6 [shape = 'u8[16384]{0}', space=vmem, size = 0x4000, scoped, tag = 'input window, operand 1, single buffered']
    #allocation7 [shape = 's32[1]{0}', space=sflag, size = 0x4, scoped, tag = 'scoped memory for tpu_custom_call.1']
    #allocation8 [shape = 'u8[1024]{0}', space=vmem, size = 0x400, scoped, tag = 'output window, operand 0, single buffered']
    %8 = vsyncpa [#allocation4], 0
    %9 = vsyncpa [#allocation7], 0
    %10 = vsyncpa [#allocation5], 0
    // Predicated region
    $region2: #{tpu_custom_call.1} parent=1 // pred_check
      _
    $region3: #{tpu_custom_call.1} parent=1 // pred_check_branch
      %12 = sbr.rel (0) target = $region5
    $region4: #{tpu_custom_call.1} parent=1 // pred_region
      %14 = vsyncadd [#allocation4], 0
      %s15 = sshll.u32 %s0, 4
      %s16 = int_to_ptr.hbm [resolvable:$true] %s15
      %s17 = sshll.u32 [#allocation3], 4
      %s18 = int_to_ptr.vmem [resolvable:$true] %s17
      %23 = dma.hbm_to_vmem [thread:$0]  %s16, 1024, %s18, [#allocation4], 128, 128, 8
    $region5: #{tpu_custom_call.1} parent=1 // pred_fallthru
      _
    // Predicated region
    $region6: #{tpu_custom_call.1} parent=1 // pred_check
      _
    $region7: #{tpu_custom_call.1} parent=1 // pred_check_branch
      %25 = sbr.rel (0) target = $region9
    $region8: #{tpu_custom_call.1} parent=1 // pred_region
      %27 = vsyncadd [#allocation7], 0
      %s28 = sshll.u32 %s1, 4
      %s29 = int_to_ptr.hbm [resolvable:$true] %s28
      %s30 = sshll.u32 [#allocation6], 4
      %s31 = int_to_ptr.vmem [resolvable:$true] %s30
      %36 = dma.hbm_to_vmem [thread:$0]  %s29, 512, %s31, [#allocation7], 128, 128, 8
    $region9: #{tpu_custom_call.1} parent=1 // pred_fallthru
      _
    // Predicated region
    $region10: #{tpu_custom_call.1} parent=1 // pred_check
      _
    $region11: #{tpu_custom_call.1} parent=1 // pred_check_branch
      %38 = sbr.rel (0) target = $region13
    $region12: #{tpu_custom_call.1} parent=1 // pred_region
      _
    $region13: #{tpu_custom_call.1} parent=1 // pred_fallthru
      _
    // Predicated region
    $region14: #{tpu_custom_call.1} parent=1 // pred_check
      _
    $region15: #{tpu_custom_call.1} parent=1 // pred_check_branch
      %40 = sbr.rel (0) target = $region17
    $region16: #{tpu_custom_call.1} parent=1 // pred_region
      %42 = dma.done [#allocation4], 1024
    $region17: #{tpu_custom_call.1} parent=1 // pred_fallthru
      _
    // Predicated region
    $region18: #{tpu_custom_call.1} parent=1 // pred_check
      _
    $region19: #{tpu_custom_call.1} parent=1 // pred_check_branch
      %44 = sbr.rel (0) target = $region21
    $region20: #{tpu_custom_call.1} parent=1 // pred_region
      %46 = dma.done [#allocation7], 512
    $region21: #{tpu_custom_call.1} parent=1 // pred_fallthru
      _
    %p47 = scmp.eq.s32.totalorder 0, 0
    // Predicated region
    $region22: #{tpu_custom_call.1} parent=1 // pred_check
      %p48 = pneg %p47
    $region23: #{tpu_custom_call.1} parent=1 // pred_check_branch
      %50 = sbr.rel (%p48) target = $region25
    $region24: #{tpu_custom_call.1} parent=1 // pred_region
      %vm51 = vcmask 254976
      %52 = vst.msk [vmem:[#allocation2] sm:$0x3] %vm51, 0.0
    $region25: #{tpu_custom_call.1} parent=1 // pred_fallthru
      _
    %v53 = vld [vmem:[#allocation2] sm:$0x3]
    %v54 = vld [vmem:[#allocation3] sm:$0xff]
    %v55 = vld [vmem:[#allocation3 + $0x8] sm:$0xff]
    %v56 = vld [vmem:[#allocation3 + $0x10] sm:$0xff]
    %v57 = vld [vmem:[#allocation3 + $0x18] sm:$0xff]
    %v58 = vld [vmem:[#allocation3 + $0x20] sm:$0xff]
    %v59 = vld [vmem:[#allocation3 + $0x28] sm:$0xff]
    %v60 = vld [vmem:[#allocation3 + $0x30] sm:$0xff]
    %v61 = vld [vmem:[#allocation3 + $0x38] sm:$0xff]
    %vm62 = vcmask 523264
    %v63 = vsel %vm62, %v54, 0.0
    %64 = vadd.xlane.f32.xlu0 %v63
    %v65 = vpop.xlane.xlu0 %64
    %v66 = vsel %vm62, %v55, 0.0
    %67 = vadd.xlane.f32.xlu0 %v66
    %v68 = vpop.xlane.xlu0 %67
    %v69 = vsel %vm62, %v56, 0.0
    %70 = vadd.xlane.f32.xlu0 %v69
    %v71 = vpop.xlane.xlu0 %70
    %v72 = vsel %vm62, %v57, 0.0
    %73 = vadd.xlane.f32.xlu0 %v72
    %v74 = vpop.xlane.xlu0 %73
    %v75 = vsel %vm62, %v58, 0.0
    %76 = vadd.xlane.f32.xlu0 %v75
    %v77 = vpop.xlane.xlu0 %76
    %v78 = vsel %vm62, %v59, 0.0
    %79 = vadd.xlane.f32.xlu0 %v78
    %v80 = vpop.xlane.xlu0 %79
    %v81 = vsel %vm62, %v60, 0.0
    %82 = vadd.xlane.f32.xlu0 %v81
    %v83 = vpop.xlane.xlu0 %82
    %v84 = vsel %vm62, %v61, 0.0
    %85 = vadd.xlane.f32.xlu0 %v84
    %v86 = vpop.xlane.xlu0 %85
    %v95 = vlaneseq
    %v96 = vand.u32 %v95, 127
    %v97 = vperm.slane %v65, %v96
    %v98 = vadd.s32 %v96, 4294967288
    %v99 = vperm.slane %v68, %v98
    %vm100 = vcmask 130112
    %v101 = vsel %vm100, %v99, %v97
    %v102 = vadd.s32 %v96, 4294967280
    %v103 = vperm.slane %v71, %v102
    %vm104 = vcmask 195712
    %v105 = vsel %vm104, %v103, %v101
    %v106 = vadd.s32 %v96, 4294967272
    %v107 = vperm.slane %v74, %v106
    %vm108 = vcmask 261312
    %v109 = vsel %vm108, %v107, %v105
    %v110 = vperm.slane %v77, %v96
    %v111 = vperm.slane %v80, %v98
    %v112 = vsel %vm100, %v111, %v110
    %v113 = vperm.slane %v83, %v102
    %v114 = vsel %vm104, %v113, %v112
    %v115 = vperm.slane %v86, %v106
    %v116 = vsel %vm108, %v115, %v114
    %vm117 = vcmask 1041409
    %v118 = vsel %vm117, %v116, %v109
    %v120 = vadd.f32 %v53, %v118
    %vm121 = vcmask 254976
    %122 = vst.msk [vmem:[#allocation2] sm:$0x3] %vm121, %v120
    // Predicated region
    $region26: #{tpu_custom_call.1} parent=1 // pred_check
      %p123 = pneg %p47
    $region27: #{tpu_custom_call.1} parent=1 // pred_check_branch
      %125 = sbr.rel (%p123) target = $region29
    $region28: #{tpu_custom_call.1} parent=1 // pred_region
      %v126 = vld [vmem:[#allocation2] sm:$0x3]
      %v127 = vmul.f32 %v126, 0.015625
      %v128 = vld [vmem:[#allocation6] sm:$0xff]
      %v129 = vld [vmem:[#allocation6 + $0x8] sm:$0xff]
      %v130 = vld [vmem:[#allocation6 + $0x10] sm:$0xff]
      %v131 = vld [vmem:[#allocation6 + $0x18] sm:$0xff]
      %v132 = vld [vmem:[%s2] sm:$0x1]
      %v134 = vperm.slane %v132, 0
      %vm136 = vcmask 261120
      %v138 = vsel %vm136, %v127, 0
      %140 = vmatpush.msra.mxu0 0.0
      %141 = vmatpush.msra.mxu0 0.0
      %142 = vmatpush.msra.mxu0 0.0
      %143 = vmatpush.msra.mxu0 0.0
      %144 = vmatpush.msra.mxu0 0.0
      %145 = vmatpush.msra.mxu0 0.0
      %146 = vmatpush.msra.mxu0 0.0
      %147 = vmatpush.msra.mxu0 0.0
      %148 = vmatpush.msra.mxu0 0.0
      %149 = vmatpush.msra.mxu0 0.0
      %150 = vmatpush.msra.mxu0 0.0
      %151 = vmatpush.msra.mxu0 0.0
      %152 = vmatpush.msra.mxu0 %v131
      %153 = vmatpush.msra.mxu0 %v130
      %154 = vmatpush.msra.mxu0 %v129
      %155 = vmatpush.msra.mxu0 %v128
      %156 = vmatmul.f32.gmra.mxu0 %v138
      %v157 = vpop.f32.mrf.mxu0
      %v158 = vadd.f32 %v134, %v157
      %159 = vdwg.mxu0
      %160 = vst [vmem:[#allocation8] sm:$0x3] %v158
    $region29: #{tpu_custom_call.1} parent=1 // pred_fallthru
      _
    // Predicated region
    $region30: #{tpu_custom_call.1} parent=1 // pred_check
      _
    $region31: #{tpu_custom_call.1} parent=1 // pred_check_branch
      %162 = sbr.rel (0) target = $region33
    $region32: #{tpu_custom_call.1} parent=1 // pred_region
      %164 = vsyncadd [#allocation5], 0
      %s166 = sshll.u32 [#allocation8], 4
      %s167 = int_to_ptr.vmem [resolvable:$true] %s166
      %s168 = sshll.u32 %s3, 4
      %s169 = int_to_ptr.hbm [resolvable:$true] %s168
      %171 = dma.vmem_to_hbm [thread:$0]  %s167, 32, %s169, [#allocation5]
    $region33: #{tpu_custom_call.1} parent=1 // pred_fallthru
      _
    // Predicated region
    $region34: #{tpu_custom_call.1} parent=1 // pred_check
      _
    $region35: #{tpu_custom_call.1} parent=1 // pred_check_branch
      %173 = sbr.rel (0) target = $region37
    $region36: #{tpu_custom_call.1} parent=1 // pred_region
      %175 = dma.done [#allocation5], 32
    $region37: #{tpu_custom_call.1} parent=1 // pred_fallthru
      _
    %176 = vsyncpa [#allocation4], 1
    %177 = vsyncpa [#allocation7], 1
    %178 = vsyncpa [#allocation5], 1

</llo_original>
